<compile_context>
chip_gen: v6e
topology: v6e:2x2x1
jax: 0.10.0
libtpu: 0.0.40
codegen_flags: <defaults>
</compile_context>

<pallas_src>
import functools

import jax
import jax.numpy as jnp
from jax.experimental import pallas as pl
from jax.experimental.pallas import tpu as pltpu


def _round_up(x, m):
    return ((x + m - 1) // m) * m


# --------------------------------------------------------------------------
# Kernel
# --------------------------------------------------------------------------
def skipgram_kernel(cw_sm, tgt_ref, vis_ref, aco_ref, emb_hbm,
                    w1_ref, b1_ref, w2_ref, b2_ref, w3_ref, b3_ref,
                    out_ref, xcat_vmem, gather_sem, *, V, E, Dv, Da):
    BT = vis_ref.shape[0]
    b0 = pl.program_id(0) * BT

    # ---- DMA gather: BT selected rows of [embed | fixed_embed] HBM -> VMEM.
    # All row copies share one semaphore (same size each); issue all, then
    # wait for all, so the per-row transfers overlap with each other.
    def _issue(i, carry):
        row = cw_sm[b0 + i]
        pltpu.make_async_copy(emb_hbm.at[row], xcat_vmem.at[i],
                              gather_sem.at[0]).start()
        return carry

    jax.lax.fori_loop(0, BT, _issue, 0)

    def _wait(i, carry):
        pltpu.make_async_copy(emb_hbm.at[0], xcat_vmem.at[i],
                              gather_sem.at[0]).wait()
        return carry

    jax.lax.fori_loop(0, BT, _wait, 0)

    xcat = xcat_vmem[...]                                          # (BT, 2E) f32
    x = xcat[:, :E]                                                # center_emb
    fixed = xcat[:, E:]                                            # fixed_emb

    # ---- fused 4-FFN stack: 3 packed matmuls in bf16, f32 accumulate ----
    h = jnp.dot(x.astype(jnp.bfloat16), w1_ref[...],
                preferred_element_type=jnp.float32) + b1_ref[...]
    h = jnp.maximum(h, 0.0)
    h = jnp.dot(h.astype(jnp.bfloat16), w2_ref[...],
                preferred_element_type=jnp.float32) + b2_ref[...]
    h = jnp.maximum(h, 0.0)
    y = jnp.dot(h.astype(jnp.bfloat16), w3_ref[...],
                preferred_element_type=jnp.float32) + b3_ref[...]  # (BT, V+Dv+Da+E)

    logits = y[:, :V]
    pred_v = y[:, V:V + Dv]
    pred_a = y[:, V + Dv:V + Dv + Da]
    rec = y[:, V + Dv + Da:]

    # ---- per-row loss partials (all f32) ----
    tgt = tgt_ref[...]                                             # (BT,1) i32, -1 => padded
    mask = (tgt >= 0).astype(jnp.float32)                          # (BT,1)

    # cross-entropy rows (reduction='none'): lse - logit[target]
    col = jax.lax.broadcasted_iota(jnp.int32, (BT, V), 1)
    m = jnp.max(logits, axis=-1, keepdims=True)
    lse = jnp.log(jnp.sum(jnp.exp(logits - m), axis=-1, keepdims=True)) + m
    tgt_logit = jnp.sum(jnp.where(col == tgt, logits, 0.0),
                        axis=-1, keepdims=True)
    p_t = lse - tgt_logit                                          # (BT,1)

    # MSE rows (mean over feature dim folded into compile-time constants)
    dv = pred_v - vis_ref[...]
    p_v = jnp.sum(dv * dv, axis=-1, keepdims=True) * (1.0 / Dv)
    da_ = pred_a - aco_ref[...]
    p_a = jnp.sum(da_ * da_, axis=-1, keepdims=True) * (1.0 / Da)

    # -cosine_similarity rows; clamping squared norms at 1e-16 == clamping
    # norms at torch's eps=1e-8
    dot = jnp.sum(rec * fixed, axis=-1, keepdims=True)
    ss_r = jnp.maximum(jnp.sum(rec * rec, axis=-1, keepdims=True), 1e-16)
    ss_f = jnp.maximum(jnp.sum(fixed * fixed, axis=-1, keepdims=True), 1e-16)
    p_r = -dot * jax.lax.rsqrt(ss_r) * jax.lax.rsqrt(ss_f)

    # ---- single combined masked reduction -> one (1, 4) store ----
    lane = jax.lax.broadcasted_iota(jnp.int32, (BT, 4), 1)
    partials = (jnp.where(lane == 0, p_t, 0.0)
                + jnp.where(lane == 1, p_v, 0.0)
                + jnp.where(lane == 2, p_a, 0.0)
                + jnp.where(lane == 3, p_r, 0.0))                  # (BT,4)
    out_ref[...] = jnp.sum(partials * mask, axis=0, keepdims=True)


# --------------------------------------------------------------------------
# Wrapper: weight packing + pallas_call
# --------------------------------------------------------------------------
def _block_diag(mats):
    n_out = sum(m.shape[1] for m in mats)
    rows, off = [], 0
    for m in mats:
        rows.append(jnp.pad(m, ((0, 0), (off, n_out - off - m.shape[1]))))
        off += m.shape[1]
    return jnp.concatenate(rows, axis=0)


def _pack_ffn_params(ffns):
    """Pack 4 FFNs (word, visual, acoustic, emb) into 3 fused layers."""
    # TODO(synk): at realistic dims, keep only the three small heads packed
    # and handle the V-sized word head separately (block-diag zeros waste MXU).
    names = ("word", "visual", "acoustic", "emb")
    w1 = jnp.concatenate([ffns[n][0] for n in names], axis=1).astype(jnp.bfloat16)
    b1 = jnp.concatenate([ffns[n][1] for n in names], axis=1)
    w2 = _block_diag([ffns[n][2] for n in names]).astype(jnp.bfloat16)
    b2 = jnp.concatenate([ffns[n][3] for n in names], axis=1)
    w3 = _block_diag([ffns[n][4] for n in names]).astype(jnp.bfloat16)
    b3 = jnp.concatenate([ffns[n][5] for n in names], axis=1)
    return w1, b1, w2, b2, w3, b3


def skipgram_losses_pallas(center_word, context_word, context_visual,
                           context_acoustic, embed, fixed_embed, ffns):
    B = center_word.shape[0]
    V, E = embed.shape
    Dv = context_visual.shape[1]
    Da = context_acoustic.shape[1]

    w1, b1, w2, b2, w3, b3 = _pack_ffn_params(ffns)
    embcat = jnp.concatenate([embed, fixed_embed], axis=1).astype(jnp.float32)

    # Batch tiling: multiple of 16 (bf16 sublane packing), larger cap to
    # amortize per-grid-step overhead and fill the MXU's M dimension.
    cap = 512 if V <= 2048 else 256
    BT = min(_round_up(B, 16), cap)
    B_pad = _round_up(B, BT)
    grid_b = B_pad // BT
    pad = B_pad - B

    # center ids -> SMEM scalar prefetch (padded rows read table row 0,
    # masked out later); target ids carry the valid-row mask via sentinel -1.
    cw = jnp.pad(center_word.astype(jnp.int32), (0, pad))          # (B_pad,)
    tg = jnp.pad(context_word.astype(jnp.int32), (0, pad),
                 constant_values=-1).reshape(B_pad, 1)
    vis = jnp.pad(context_visual.astype(jnp.float32), ((0, pad), (0, 0)))
    aco = jnp.pad(context_acoustic.astype(jnp.float32), ((0, pad), (0, 0)))

    def batch_spec(d):
        return pl.BlockSpec((BT, d), lambda b, cw_sm: (b, 0))

    def resident_spec(shape):
        # Grid-invariant weights: constant index_map keeps them VMEM-resident.
        return pl.BlockSpec(shape, lambda b, cw_sm: (0, 0))

    in_specs = [
        batch_spec(1),                        # context_word ids (+ mask sentinel)
        batch_spec(Dv),                       # context_visual
        batch_spec(Da),                       # context_acoustic
        pl.BlockSpec(memory_space=pl.ANY),    # [embed | fixed] table, stays in HBM
        resident_spec(w1.shape), resident_spec(b1.shape),
        resident_spec(w2.shape), resident_spec(b2.shape),
        resident_spec(w3.shape), resident_spec(b3.shape),
    ]

    # Explicit VMEM budget: weights (x2 for default double-buffering),
    # batch blocks, gather scratch, activations, plus margin.
    n1, n2, n3 = w1.shape[1], w2.shape[1], w3.shape[1]
    est = (2 * 2 * int(w1.size + w2.size + w3.size)       # bf16 weights, 2 bufs
           + 2 * 4 * (n1 + n2 + n3)                       # f32 biases, 2 bufs
           + 2 * 4 * BT * (1 + Dv + Da)                   # batch blocks
           + 4 * BT * 2 * E                               # gather scratch
           + 2 * 4 * BT * (n1 + n2 + n3 + V))             # activations + slack
    vmem_limit = int(min(60 * 2 ** 20, max(16 * 2 ** 20, 2 * est)))

    kernel = functools.partial(skipgram_kernel, V=V, E=E, Dv=Dv, Da=Da)

    partial_sums = pl.pallas_call(
        kernel,
        out_shape=jax.ShapeDtypeStruct((grid_b, 1, 4), jnp.float32),
        grid_spec=pltpu.PrefetchScalarGridSpec(
            num_scalar_prefetch=1,
            grid=(grid_b,),
            in_specs=in_specs,
            out_specs=pl.BlockSpec((None, 1, 4), lambda b, cw_sm: (b, 0, 0)),
            scratch_shapes=[
                pltpu.VMEM((BT, 2 * E), jnp.float32),     # gathered [x | fixed]
                pltpu.SemaphoreType.DMA((1,)),
            ],
        ),
        compiler_params=pltpu.CompilerParams(
            dimension_semantics=("parallel",),
            vmem_limit_bytes=vmem_limit),
    )(cw, tg, vis, aco, embcat, w1, b1, w2, b2, w3, b3)

    losses = jnp.sum(partial_sums.reshape(grid_b, 4), axis=0)      # (4,)
    return losses[0], losses[1], losses[2], losses[3]


# --------------------------------------------------------------------------
# Parameter construction (PyTorch nn.Linear-style init; W stored as (in, out))
# --------------------------------------------------------------------------
def make_linear_params(key, in_dim, out_dim):
    kw, kb = jax.random.split(key)
    bound = 1.0 / jnp.sqrt(jnp.float32(in_dim))
    w = jax.random.uniform(kw, (out_dim, in_dim), jnp.float32, -bound, bound)
    b = jax.random.uniform(kb, (out_dim,), jnp.float32, -bound, bound)
    return w.T, b.reshape(1, out_dim)


def make_ffn_params(key, in_dim, h1, h2, out_dim):
    k1, k2, k3 = jax.random.split(key, 3)
    w1, b1 = make_linear_params(k1, in_dim, h1)
    w2, b2 = make_linear_params(k2, h1, h2)
    w3, b3 = make_linear_params(k3, h2, out_dim)
    return [w1, b1, w2, b2, w3, b3]


def skipgram_forward(params, center_word, context_word, context_visual,
                     context_acoustic):
    loss_t, loss_v, loss_a, loss_rec = skipgram_losses_pallas(
        center_word, context_word, context_visual, context_acoustic,
        params["embed"], params["fixed_embed"], params["ffns"])

    t_l, v_l, a_l, r_l = (params["t_lambda"], params["v_lambda"],
                          params["a_lambda"], params["rec_lambda"])
    loss = (t_l ** -2 * loss_t + v_l ** -2 * loss_v + a_l ** -2 * loss_a
            + r_l * loss_rec + jnp.log(t_l * v_l * a_l * r_l))
    return loss, (loss_t, loss_v, loss_a, loss_rec)


if __name__ == "__main__":
    # small shapes consistent with the module
    B = 8
    emb_dim = 32
    vocab_size = 128
    visual_dim = 16
    acoustic_dim = 8

    root = jax.random.PRNGKey(0)
    keys = jax.random.split(root, 12)

    params = {
        "embed": jax.random.normal(keys[0], (vocab_size, emb_dim), jnp.float32),
        "fixed_embed": jax.random.normal(keys[1], (vocab_size, emb_dim), jnp.float32),
        "ffns": {
            "word": make_ffn_params(keys[2], emb_dim, emb_dim * 2, vocab_size, vocab_size),
            "visual": make_ffn_params(keys[3], emb_dim, emb_dim * 2, visual_dim * 2, visual_dim),
            "acoustic": make_ffn_params(keys[4], emb_dim, emb_dim * 2, acoustic_dim * 2, acoustic_dim),
            "emb": make_ffn_params(keys[5], emb_dim, emb_dim * 2, emb_dim * 2, emb_dim),
        },
        "t_lambda": jnp.abs(jax.random.normal(keys[6], (), jnp.float32)),
        "v_lambda": jnp.abs(jax.random.normal(keys[7], (), jnp.float32)),
        "a_lambda": jnp.abs(jax.random.normal(keys[8], (), jnp.float32)),
        "rec_lambda": jnp.abs(jax.random.normal(keys[9], (), jnp.float32)),
    }

    center_word = jax.random.randint(keys[10], (B,), 0, vocab_size, jnp.int32)
    context_word = jax.random.randint(keys[11], (B,), 0, vocab_size, jnp.int32)
    kv, ka = jax.random.split(jax.random.fold_in(root, 99))
    context_visual = jax.random.normal(kv, (B, visual_dim), jnp.float32)
    context_acoustic = jax.random.normal(ka, (B, acoustic_dim), jnp.float32)

    loss, (lt, lv, la, lrec) = jax.jit(skipgram_forward)(
        params, center_word, context_word, context_visual, context_acoustic)
    jax.block_until_ready(loss)
    _ = (float(lt), float(lv), float(la), float(lrec))  # mirrors .item() returns
    print("KERNEL_OK")
</pallas_src>

<mosaic_0001>
module attributes {stable_mosaic.version = 11 : i64} {
  func.func @skipgram_kernel(%arg0: i32, %arg1: memref<16xi32, #tpu.memory_space<smem>>, %arg2: memref<16x1xi32, #tpu.memory_space<vmem>>, %arg3: memref<16x16xf32, #tpu.memory_space<vmem>>, %arg4: memref<16x8xf32, #tpu.memory_space<vmem>>, %arg5: memref<128x64xf32, #tpu.memory_space<any>>, %arg6: memref<32x256xbf16, #tpu.memory_space<vmem>>, %arg7: memref<1x256xf32, #tpu.memory_space<vmem>>, %arg8: memref<256x240xbf16, #tpu.memory_space<vmem>>, %arg9: memref<1x240xf32, #tpu.memory_space<vmem>>, %arg10: memref<240x184xbf16, #tpu.memory_space<vmem>>, %arg11: memref<1x184xf32, #tpu.memory_space<vmem>>, %arg12: memref<1x1x4xf32, #tpu.memory_space<vmem>>, %arg13: memref<16x64xf32, #tpu.memory_space<vmem>>, %arg14: memref<1x!tpu.dma_semaphore, #tpu.memory_space<semaphore_mem>>) attributes {dimension_semantics = [#tpu.dimension_semantics<parallel>], iteration_bounds = array<i64: 1>, scalar_prefetch = 1 : i64, scratch_operands = 2 : i64, tpu.core_type = #tpu.core_type<tc>, window_params = [{transform_indices = @transform_0, window_bounds = array<i64: 16, 1>}, {transform_indices = @transform_1, window_bounds = array<i64: 16, 16>}, {transform_indices = @transform_2, window_bounds = array<i64: 16, 8>}, {}, {pipeline_mode = #tpu.pipeline_mode<synchronous>, transform_indices = @transform_4, window_bounds = array<i64: 32, 256>}, {pipeline_mode = #tpu.pipeline_mode<synchronous>, transform_indices = @transform_5, window_bounds = array<i64: 1, 256>}, {pipeline_mode = #tpu.pipeline_mode<synchronous>, transform_indices = @transform_6, window_bounds = array<i64: 256, 240>}, {pipeline_mode = #tpu.pipeline_mode<synchronous>, transform_indices = @transform_7, window_bounds = array<i64: 1, 240>}, {pipeline_mode = #tpu.pipeline_mode<synchronous>, transform_indices = @transform_8, window_bounds = array<i64: 240, 184>}, {pipeline_mode = #tpu.pipeline_mode<synchronous>, transform_indices = @transform_9, window_bounds = array<i64: 1, 184>}, {transform_indices = @transform_10, window_bounds = array<i64: 1, 1, 4>}]} {
    %c16_i32 = arith.constant 16 : i32
    %0 = arith.muli %arg0, %c16_i32 : i32
    %c0_i32 = arith.constant 0 : i32
    %c16_i32_0 = arith.constant 16 : i32
    %1 = arith.addi %c0_i32, %c16_i32_0 : i32
    %c1_i32 = arith.constant 1 : i32
    scf.for %arg15 = %c0_i32 to %1 step %c1_i32  : i32 {
      %122 = arith.addi %0, %arg15 : i32
      %123 = arith.index_cast %122 : i32 to index
      %124 = memref.load %arg1[%123] : memref<16xi32, #tpu.memory_space<smem>>
      %c0_i32_54 = arith.constant 0 : i32
      %c0_i32_55 = arith.constant 0 : i32
      %125 = tpu.memref_slice %arg5[%124, %c0_i32_55] : memref<128x64xf32, #tpu.memory_space<any>> -> memref<1x64xf32, #tpu.memory_space<any>>
      %126 = tpu.memref_squeeze %125 : memref<1x64xf32, #tpu.memory_space<any>> -> memref<64xf32, #tpu.memory_space<any>>
      %c0_i32_56 = arith.constant 0 : i32
      %127 = tpu.memref_slice %arg13[%arg15, %c0_i32_56] : memref<16x64xf32, #tpu.memory_space<vmem>> -> memref<1x64xf32, #tpu.memory_space<vmem>>
      %128 = tpu.memref_squeeze %127 : memref<1x64xf32, #tpu.memory_space<vmem>> -> memref<64xf32, #tpu.memory_space<vmem>>
      %129 = tpu.memref_slice %arg14[%c0_i32_54] : memref<1x!tpu.dma_semaphore, #tpu.memory_space<semaphore_mem>> -> memref<1x!tpu.dma_semaphore, #tpu.memory_space<semaphore_mem>>
      %130 = tpu.memref_squeeze %129 : memref<1x!tpu.dma_semaphore, #tpu.memory_space<semaphore_mem>> -> memref<!tpu.dma_semaphore, #tpu.memory_space<semaphore_mem>>
      tpu.enqueue_dma source(%126 : memref<64xf32, #tpu.memory_space<any>>) target(%128 : memref<64xf32, #tpu.memory_space<vmem>>) target_semaphore(%130 : memref<!tpu.dma_semaphore, #tpu.memory_space<semaphore_mem>>)
    }
    %c16_i32_1 = arith.constant 16 : i32
    %c0_i32_2 = arith.constant 0 : i32
    %c16_i32_3 = arith.constant 16 : i32
    %2 = arith.addi %c0_i32_2, %c16_i32_3 : i32
    %c1_i32_4 = arith.constant 1 : i32
    scf.for %arg15 = %c0_i32_2 to %2 step %c1_i32_4  : i32 {
      %c0_i32_54 = arith.constant 0 : i32
      %c0_i32_55 = arith.constant 0 : i32
      %c0_i32_56 = arith.constant 0 : i32
      %122 = tpu.memref_slice %arg5[%c0_i32_54, %c0_i32_56] : memref<128x64xf32, #tpu.memory_space<any>> -> memref<1x64xf32, #tpu.memory_space<any>>
      %123 = tpu.memref_squeeze %122 : memref<1x64xf32, #tpu.memory_space<any>> -> memref<64xf32, #tpu.memory_space<any>>
      %c0_i32_57 = arith.constant 0 : i32
      %124 = tpu.memref_slice %arg13[%arg15, %c0_i32_57] : memref<16x64xf32, #tpu.memory_space<vmem>> -> memref<1x64xf32, #tpu.memory_space<vmem>>
      %125 = tpu.memref_squeeze %124 : memref<1x64xf32, #tpu.memory_space<vmem>> -> memref<64xf32, #tpu.memory_space<vmem>>
      %126 = tpu.memref_slice %arg14[%c0_i32_55] : memref<1x!tpu.dma_semaphore, #tpu.memory_space<semaphore_mem>> -> memref<1x!tpu.dma_semaphore, #tpu.memory_space<semaphore_mem>>
      %127 = tpu.memref_squeeze %126 : memref<1x!tpu.dma_semaphore, #tpu.memory_space<semaphore_mem>> -> memref<!tpu.dma_semaphore, #tpu.memory_space<semaphore_mem>>
      tpu.wait_dma2 semaphore(%127 : memref<!tpu.dma_semaphore, #tpu.memory_space<semaphore_mem>>) src(%123 : memref<64xf32, #tpu.memory_space<any>>) dst(%125 : memref<64xf32, #tpu.memory_space<vmem>>)
    }
    %c16_i32_5 = arith.constant 16 : i32
    %c0 = arith.constant 0 : index
    %c0_6 = arith.constant 0 : index
    %3 = vector.load %arg13[%c0, %c0_6] : memref<16x64xf32, #tpu.memory_space<vmem>>, vector<16x64xf32>
    %4 = vector.extract_strided_slice %3 {offsets = [0, 0], sizes = [16, 32], strides = [1, 1]} : vector<16x64xf32> to vector<16x32xf32>
    %5 = vector.extract_strided_slice %3 {offsets = [0, 32], sizes = [16, 32], strides = [1, 1]} : vector<16x64xf32> to vector<16x32xf32>
    %6 = arith.truncf %4 : vector<16x32xf32> to vector<16x32xbf16>
    %c0_7 = arith.constant 0 : index
    %c0_8 = arith.constant 0 : index
    %7 = vector.load %arg6[%c0_7, %c0_8] : memref<32x256xbf16, #tpu.memory_space<vmem>>, vector<32x256xbf16>
    %cst = arith.constant dense<0.000000e+00> : vector<16x256xf32>
    %8 = tpu.matmul %6, %7, %cst {dimension_numbers = #tpu.dot_dimension_numbers<[1], [0], [0], [1], [0, 0, 1, 1], [], []>} : vector<16x32xbf16>, vector<32x256xbf16>, vector<16x256xf32> -> vector<16x256xf32>
    %c0_9 = arith.constant 0 : index
    %c0_10 = arith.constant 0 : index
    %9 = vector.load %arg7[%c0_9, %c0_10] : memref<1x256xf32, #tpu.memory_space<vmem>>, vector<1x256xf32>
    %10 = vector.broadcast %9 : vector<1x256xf32> to vector<16x256xf32>
    %11 = arith.addf %8, %10 : vector<16x256xf32>
    %cst_11 = arith.constant 0.000000e+00 : f32
    %12 = vector.broadcast %cst_11 : f32 to vector<16x256xf32>
    %13 = arith.maximumf %11, %12 : vector<16x256xf32>
    %14 = arith.truncf %13 : vector<16x256xf32> to vector<16x256xbf16>
    %c0_12 = arith.constant 0 : index
    %c0_13 = arith.constant 0 : index
    %15 = vector.load %arg8[%c0_12, %c0_13] : memref<256x240xbf16, #tpu.memory_space<vmem>>, vector<256x240xbf16>
    %cst_14 = arith.constant dense<0.000000e+00> : vector<16x240xf32>
    %16 = tpu.matmul %14, %15, %cst_14 {dimension_numbers = #tpu.dot_dimension_numbers<[1], [0], [0], [1], [0, 0, 1, 1], [], []>} : vector<16x256xbf16>, vector<256x240xbf16>, vector<16x240xf32> -> vector<16x240xf32>
    %c0_15 = arith.constant 0 : index
    %c0_16 = arith.constant 0 : index
    %17 = vector.load %arg9[%c0_15, %c0_16] : memref<1x240xf32, #tpu.memory_space<vmem>>, vector<1x240xf32>
    %18 = vector.broadcast %17 : vector<1x240xf32> to vector<16x240xf32>
    %19 = arith.addf %16, %18 : vector<16x240xf32>
    %cst_17 = arith.constant 0.000000e+00 : f32
    %20 = vector.broadcast %cst_17 : f32 to vector<16x240xf32>
    %21 = arith.maximumf %19, %20 : vector<16x240xf32>
    %22 = arith.truncf %21 : vector<16x240xf32> to vector<16x240xbf16>
    %c0_18 = arith.constant 0 : index
    %c0_19 = arith.constant 0 : index
    %23 = vector.load %arg10[%c0_18, %c0_19] : memref<240x184xbf16, #tpu.memory_space<vmem>>, vector<240x184xbf16>
    %cst_20 = arith.constant dense<0.000000e+00> : vector<16x184xf32>
    %24 = tpu.matmul %22, %23, %cst_20 {dimension_numbers = #tpu.dot_dimension_numbers<[1], [0], [0], [1], [0, 0, 1, 1], [], []>} : vector<16x240xbf16>, vector<240x184xbf16>, vector<16x184xf32> -> vector<16x184xf32>
    %c0_21 = arith.constant 0 : index
    %c0_22 = arith.constant 0 : index
    %25 = vector.load %arg11[%c0_21, %c0_22] : memref<1x184xf32, #tpu.memory_space<vmem>>, vector<1x184xf32>
    %26 = vector.broadcast %25 : vector<1x184xf32> to vector<16x184xf32>
    %27 = arith.addf %24, %26 : vector<16x184xf32>
    %28 = vector.extract_strided_slice %27 {offsets = [0, 0], sizes = [16, 128], strides = [1, 1]} : vector<16x184xf32> to vector<16x128xf32>
    %29 = vector.extract_strided_slice %27 {offsets = [0, 128], sizes = [16, 16], strides = [1, 1]} : vector<16x184xf32> to vector<16x16xf32>
    %30 = vector.extract_strided_slice %27 {offsets = [0, 144], sizes = [16, 8], strides = [1, 1]} : vector<16x184xf32> to vector<16x8xf32>
    %31 = vector.extract_strided_slice %27 {offsets = [0, 152], sizes = [16, 32], strides = [1, 1]} : vector<16x184xf32> to vector<16x32xf32>
    %c0_23 = arith.constant 0 : index
    %c0_24 = arith.constant 0 : index
    %32 = vector.load %arg2[%c0_23, %c0_24] : memref<16x1xi32, #tpu.memory_space<vmem>>, vector<16x1xi32>
    %c0_i32_25 = arith.constant 0 : i32
    %33 = vector.broadcast %c0_i32_25 : i32 to vector<16x1xi32>
    %34 = arith.cmpi sge, %32, %33 : vector<16x1xi32>
    %35 = arith.extui %34 : vector<16x1xi1> to vector<16x1xi32>
    %36 = arith.sitofp %35 : vector<16x1xi32> to vector<16x1xf32>
    %37 = tpu.iota {dimensions = array<i32: 1>} : vector<16x128xi32>
    %cst_26 = arith.constant dense<0xFF800000> : vector<16xf32>
    %38 = vector.multi_reduction <maximumf>, %28, %cst_26 [1] : vector<16x128xf32> to vector<16xf32>
    %39 = vector.shape_cast %38 : vector<16xf32> to vector<16x1xf32>
    %40 = vector.broadcast %39 : vector<16x1xf32> to vector<16x128xf32>
    %41 = arith.subf %28, %40 : vector<16x128xf32>
    %42 = math.exp %41 : vector<16x128xf32>
    %cst_27 = arith.constant dense<0.000000e+00> : vector<16xf32>
    %43 = vector.multi_reduction <add>, %42, %cst_27 [1] : vector<16x128xf32> to vector<16xf32>
    %44 = vector.shape_cast %43 : vector<16xf32> to vector<16x1xf32>
    %45 = math.log %44 : vector<16x1xf32>
    %46 = arith.addf %45, %39 : vector<16x1xf32>
    %47 = vector.broadcast %32 : vector<16x1xi32> to vector<16x128xi32>
    %48 = arith.cmpi eq, %37, %47 : vector<16x128xi32>
    %cst_28 = arith.constant 0.000000e+00 : f32
    %49 = vector.broadcast %cst_28 : f32 to vector<16x128xf32>
    %50 = arith.select %48, %28, %49 : vector<16x128xi1>, vector<16x128xf32>
    %cst_29 = arith.constant dense<0.000000e+00> : vector<16xf32>
    %51 = vector.multi_reduction <add>, %50, %cst_29 [1] : vector<16x128xf32> to vector<16xf32>
    %52 = vector.shape_cast %51 : vector<16xf32> to vector<16x1xf32>
    %53 = arith.subf %46, %52 : vector<16x1xf32>
    %c0_30 = arith.constant 0 : index
    %c0_31 = arith.constant 0 : index
    %54 = vector.load %arg3[%c0_30, %c0_31] : memref<16x16xf32, #tpu.memory_space<vmem>>, vector<16x16xf32>
    %55 = arith.subf %29, %54 : vector<16x16xf32>
    %56 = arith.mulf %55, %55 : vector<16x16xf32>
    %cst_32 = arith.constant dense<0.000000e+00> : vector<16xf32>
    %57 = vector.multi_reduction <add>, %56, %cst_32 [1] : vector<16x16xf32> to vector<16xf32>
    %58 = vector.shape_cast %57 : vector<16xf32> to vector<16x1xf32>
    %cst_33 = arith.constant 6.250000e-02 : f32
    %59 = vector.broadcast %cst_33 : f32 to vector<16x1xf32>
    %60 = arith.mulf %58, %59 : vector<16x1xf32>
    %c0_34 = arith.constant 0 : index
    %c0_35 = arith.constant 0 : index
    %61 = vector.load %arg4[%c0_34, %c0_35] : memref<16x8xf32, #tpu.memory_space<vmem>>, vector<16x8xf32>
    %62 = arith.subf %30, %61 : vector<16x8xf32>
    %63 = arith.mulf %62, %62 : vector<16x8xf32>
    %cst_36 = arith.constant dense<0.000000e+00> : vector<16xf32>
    %64 = vector.multi_reduction <add>, %63, %cst_36 [1] : vector<16x8xf32> to vector<16xf32>
    %65 = vector.shape_cast %64 : vector<16xf32> to vector<16x1xf32>
    %cst_37 = arith.constant 1.250000e-01 : f32
    %66 = vector.broadcast %cst_37 : f32 to vector<16x1xf32>
    %67 = arith.mulf %65, %66 : vector<16x1xf32>
    %68 = arith.mulf %31, %5 : vector<16x32xf32>
    %cst_38 = arith.constant dense<0.000000e+00> : vector<16xf32>
    %69 = vector.multi_reduction <add>, %68, %cst_38 [1] : vector<16x32xf32> to vector<16xf32>
    %70 = vector.shape_cast %69 : vector<16xf32> to vector<16x1xf32>
    %71 = arith.mulf %31, %31 : vector<16x32xf32>
    %cst_39 = arith.constant dense<0.000000e+00> : vector<16xf32>
    %72 = vector.multi_reduction <add>, %71, %cst_39 [1] : vector<16x32xf32> to vector<16xf32>
    %73 = vector.shape_cast %72 : vector<16xf32> to vector<16x1xf32>
    %cst_40 = arith.constant 1.000000e-16 : f32
    %74 = vector.broadcast %cst_40 : f32 to vector<16x1xf32>
    %75 = arith.maximumf %73, %74 : vector<16x1xf32>
    %76 = arith.mulf %5, %5 : vector<16x32xf32>
    %cst_41 = arith.constant dense<0.000000e+00> : vector<16xf32>
    %77 = vector.multi_reduction <add>, %76, %cst_41 [1] : vector<16x32xf32> to vector<16xf32>
    %78 = vector.shape_cast %77 : vector<16xf32> to vector<16x1xf32>
    %cst_42 = arith.constant 1.000000e-16 : f32
    %79 = vector.broadcast %cst_42 : f32 to vector<16x1xf32>
    %80 = arith.maximumf %78, %79 : vector<16x1xf32>
    %cst_43 = arith.constant 0.000000e+00 : f32
    %81 = vector.broadcast %cst_43 : f32 to vector<16x1xf32>
    %82 = arith.subf %81, %70 : vector<16x1xf32>
    %83 = math.rsqrt %75 : vector<16x1xf32>
    %84 = arith.mulf %82, %83 : vector<16x1xf32>
    %85 = math.rsqrt %80 : vector<16x1xf32>
    %86 = arith.mulf %84, %85 : vector<16x1xf32>
    %87 = tpu.iota {dimensions = array<i32: 1>} : vector<16x4xi32>
    %c0_i32_44 = arith.constant 0 : i32
    %88 = vector.broadcast %c0_i32_44 : i32 to vector<16x4xi32>
    %89 = arith.cmpi eq, %87, %88 : vector<16x4xi32>
    %cst_45 = arith.constant 0.000000e+00 : f32
    %90 = vector.shape_cast %53 : vector<16x1xf32> to vector<16x1xf32>
    %91 = vector.broadcast %90 : vector<16x1xf32> to vector<16x4xf32>
    %92 = vector.broadcast %cst_45 : f32 to vector<16x4xf32>
    %93 = arith.select %89, %91, %92 : vector<16x4xi1>, vector<16x4xf32>
    %c1_i32_46 = arith.constant 1 : i32
    %94 = vector.broadcast %c1_i32_46 : i32 to vector<16x4xi32>
    %95 = arith.cmpi eq, %87, %94 : vector<16x4xi32>
    %cst_47 = arith.constant 0.000000e+00 : f32
    %96 = vector.shape_cast %60 : vector<16x1xf32> to vector<16x1xf32>
    %97 = vector.broadcast %96 : vector<16x1xf32> to vector<16x4xf32>
    %98 = vector.broadcast %cst_47 : f32 to vector<16x4xf32>
    %99 = arith.select %95, %97, %98 : vector<16x4xi1>, vector<16x4xf32>
    %100 = arith.addf %93, %99 : vector<16x4xf32>
    %c2_i32 = arith.constant 2 : i32
    %101 = vector.broadcast %c2_i32 : i32 to vector<16x4xi32>
    %102 = arith.cmpi eq, %87, %101 : vector<16x4xi32>
    %cst_48 = arith.constant 0.000000e+00 : f32
    %103 = vector.shape_cast %67 : vector<16x1xf32> to vector<16x1xf32>
    %104 = vector.broadcast %103 : vector<16x1xf32> to vector<16x4xf32>
    %105 = vector.broadcast %cst_48 : f32 to vector<16x4xf32>
    %106 = arith.select %102, %104, %105 : vector<16x4xi1>, vector<16x4xf32>
    %107 = arith.addf %100, %106 : vector<16x4xf32>
    %c3_i32 = arith.constant 3 : i32
    %108 = vector.broadcast %c3_i32 : i32 to vector<16x4xi32>
    %109 = arith.cmpi eq, %87, %108 : vector<16x4xi32>
    %cst_49 = arith.constant 0.000000e+00 : f32
    %110 = vector.shape_cast %86 : vector<16x1xf32> to vector<16x1xf32>
    %111 = vector.broadcast %110 : vector<16x1xf32> to vector<16x4xf32>
    %112 = vector.broadcast %cst_49 : f32 to vector<16x4xf32>
    %113 = arith.select %109, %111, %112 : vector<16x4xi1>, vector<16x4xf32>
    %114 = arith.addf %107, %113 : vector<16x4xf32>
    %115 = vector.broadcast %36 : vector<16x1xf32> to vector<16x4xf32>
    %116 = arith.mulf %114, %115 : vector<16x4xf32>
    %cst_50 = arith.constant dense<0.000000e+00> : vector<4xf32>
    %117 = vector.multi_reduction <add>, %116, %cst_50 [0] : vector<16x4xf32> to vector<4xf32>
    %118 = vector.shape_cast %117 : vector<4xf32> to vector<1x4xf32>
    %c0_51 = arith.constant 0 : index
    %c0_52 = arith.constant 0 : index
    %c0_53 = arith.constant 0 : index
    %119 = vector.load %arg12[%c0_51, %c0_52, %c0_53] : memref<1x1x4xf32, #tpu.memory_space<vmem>>, vector<1x1x4xf32>
    %120 = vector.shape_cast %119 : vector<1x1x4xf32> to vector<1x4xf32>
    %121 = vector.shape_cast %118 : vector<1x4xf32> to vector<1x1x4xf32>
    tpu.vector_store %arg12[%c0_51, %c0_52, %c0_53], %121 {strides = array<i32>} : memref<1x1x4xf32, #tpu.memory_space<vmem>>, vector<1x1x4xf32>,
    return
  }
  func.func @transform_0(%arg0: i32, %arg1: memref<16xi32, #tpu.memory_space<smem>>) -> (i32, i32) {
    %c0_i32 = arith.constant 0 : i32
    %c0_i32_0 = arith.constant 0 : i32
    return %arg0, %c0_i32 : i32, i32
  }
  func.func @transform_1(%arg0: i32, %arg1: memref<16xi32, #tpu.memory_space<smem>>) -> (i32, i32) {
    %c0_i32 = arith.constant 0 : i32
    %c0_i32_0 = arith.constant 0 : i32
    return %arg0, %c0_i32 : i32, i32
  }
  func.func @transform_2(%arg0: i32, %arg1: memref<16xi32, #tpu.memory_space<smem>>) -> (i32, i32) {
    %c0_i32 = arith.constant 0 : i32
    %c0_i32_0 = arith.constant 0 : i32
    return %arg0, %c0_i32 : i32, i32
  }
  func.func @transform_4(%arg0: i32, %arg1: memref<16xi32, #tpu.memory_space<smem>>) -> (i32, i32) {
    %c0_i32 = arith.constant 0 : i32
    %c0_i32_0 = arith.constant 0 : i32
    %c0_i32_1 = arith.constant 0 : i32
    return %c0_i32, %c0_i32_0 : i32, i32
  }
  func.func @transform_5(%arg0: i32, %arg1: memref<16xi32, #tpu.memory_space<smem>>) -> (i32, i32) {
    %c0_i32 = arith.constant 0 : i32
    %c0_i32_0 = arith.constant 0 : i32
    %c0_i32_1 = arith.constant 0 : i32
    return %c0_i32, %c0_i32_0 : i32, i32
  }
  func.func @transform_6(%arg0: i32, %arg1: memref<16xi32, #tpu.memory_space<smem>>) -> (i32, i32) {
    %c0_i32 = arith.constant 0 : i32
    %c0_i32_0 = arith.constant 0 : i32
    %c0_i32_1 = arith.constant 0 : i32
    return %c0_i32, %c0_i32_0 : i32, i32
  }
  func.func @transform_7(%arg0: i32, %arg1: memref<16xi32, #tpu.memory_space<smem>>) -> (i32, i32) {
    %c0_i32 = arith.constant 0 : i32
    %c0_i32_0 = arith.constant 0 : i32
    %c0_i32_1 = arith.constant 0 : i32
    return %c0_i32, %c0_i32_0 : i32, i32
  }
  func.func @transform_8(%arg0: i32, %arg1: memref<16xi32, #tpu.memory_space<smem>>) -> (i32, i32) {
    %c0_i32 = arith.constant 0 : i32
    %c0_i32_0 = arith.constant 0 : i32
    %c0_i32_1 = arith.constant 0 : i32
    return %c0_i32, %c0_i32_0 : i32, i32
  }
  func.func @transform_9(%arg0: i32, %arg1: memref<16xi32, #tpu.memory_space<smem>>) -> (i32, i32) {
    %c0_i32 = arith.constant 0 : i32
    %c0_i32_0 = arith.constant 0 : i32
    %c0_i32_1 = arith.constant 0 : i32
    return %c0_i32, %c0_i32_0 : i32, i32
  }
  func.func @transform_10(%arg0: i32, %arg1: memref<16xi32, #tpu.memory_space<smem>>) -> (i32, i32, i32) {
    %c0_i32 = arith.constant 0 : i32
    %c0_i32_0 = arith.constant 0 : i32
    %c0_i32_1 = arith.constant 0 : i32
    return %arg0, %c0_i32, %c0_i32_0 : i32, i32, i32
  }
}

</mosaic_0001>

<llo_original>
// kernel: skipgram_forward.1
$region0: #{skipgram_forward.1}
  #allocation0 [shape = 'u32[]', space=smem, size = 0x4, offset = 0x4, fixed_abs, tag = 'smem constant byte address 0x4 - core index']
  #allocation1 [shape = 'u32[144,128]{1,0:T(1,128)}', space=vmem, size = 0x12000, scoped, tag = 'internal scratch']
  #allocation2 [shape = 'f32[16,64]{1,0:T(8,128)}', space=vmem, size = 0x2000, scoped, tag = 'scratch operand']
  #allocation3 [shape = 's32[1]{0}', space=sflag, size = 0x4, scoped, tag = 'scratch operand']
  #allocation4 [shape = 's32[1]{0}', space=sflag, size = 0x4, scoped, tag = 'scoped memory for skipgram_forward.1']
  #allocation5 [shape = 'u8[512]{0}', space=smem, size = 0x200, scoped, tag = 'prefetched SMEM operand 0']
  #allocation6 [shape = 's32[]', space=sflag, size = 0x4, offset = 0, fixed_abs, tag = 'sflag constant byte address 0x0 - dummy sync flag']
  %s0 = inlined_call_operand.vmem [shape: s32[16], index: 0, kind: input, shape index: {}]
  %s1 = inlined_call_operand.vmem [shape: s32[16,1], index: 1, kind: input, shape index: {}]
  %s2 = inlined_call_operand.vmem [shape: f32[16,16], index: 2, kind: input, shape index: {}]
  %s3 = inlined_call_operand.vmem [shape: f32[16,8], index: 3, kind: input, shape index: {}]
  %s4 = inlined_call_operand.vmem [shape: f32[128,64], index: 4, kind: input, shape index: {}]
  %s5 = inlined_call_operand.vmem [shape: bf16[32,256], index: 5, kind: input, shape index: {}]
  %s6 = inlined_call_operand.vmem [shape: f32[1,256], index: 6, kind: input, shape index: {}]
  %s7 = inlined_call_operand.vmem [shape: bf16[256,240], index: 7, kind: input, shape index: {}]
  %s8 = inlined_call_operand.vmem [shape: f32[1,240], index: 8, kind: input, shape index: {}]
  %s9 = inlined_call_operand.vmem [shape: bf16[240,184], index: 9, kind: input, shape index: {}]
  %s10 = inlined_call_operand.vmem [shape: f32[1,184], index: 10, kind: input, shape index: {}]
  %s11 = inlined_call_operand.vmem [shape: f32[1,1,4], index: 11, kind: output, shape index: {}]
  %s12 = sld [smem:[#allocation0]]
  $region90: #{skipgram_forward.1} parent=0
    _
  %s14 = ssub.s32 1, %s12
  %s15 = scalar_select 0, %s14, %s12
  %s16 = sshll.u32 %s0, 4
  %s17 = int_to_ptr.vmem [resolvable:$true] %s16
  %19 = dma.vmem_to_smem %s17, 16, [#allocation5], [#allocation4]
  %20 = dma.done [#allocation4], 16
  %21 = sfence
  // Predicated region
  $region2: #{skipgram_forward.1} parent=0 // pred_check
    _
  $region3: #{skipgram_forward.1} parent=0 // pred_check_branch
    %23 = sbr.rel (0) target = $region5
  $region4: #{skipgram_forward.1} parent=0 // pred_region
    _
  $region5: #{skipgram_forward.1} parent=0 // pred_fallthru
    _
  // Predicated region
  $region6: #{skipgram_forward.1} parent=0 // pred_check
    _
  $region7: #{skipgram_forward.1} parent=0 // pred_check_branch
    %25 = sbr.rel (0) target = $region9
  $region8: #{skipgram_forward.1} parent=0 // pred_region
    _
  $region9: #{skipgram_forward.1} parent=0 // pred_fallthru
    _
  // Predicated region
  $region10: #{skipgram_forward.1} parent=0 // pred_check
    _
  $region11: #{skipgram_forward.1} parent=0 // pred_check_branch
    %27 = sbr.rel (0) target = $region13
  $region12: #{skipgram_forward.1} parent=0 // pred_region
    _
  $region13: #{skipgram_forward.1} parent=0 // pred_fallthru
    _
  // Predicated region
  $region14: #{skipgram_forward.1} parent=0 // pred_check
    _
  $region15: #{skipgram_forward.1} parent=0 // pred_check_branch
    %29 = sbr.rel (0) target = $region17
  $region16: #{skipgram_forward.1} parent=0 // pred_region
    _
  $region17: #{skipgram_forward.1} parent=0 // pred_fallthru
    _
  // Predicated region
  $region18: #{skipgram_forward.1} parent=0 // pred_check
    _
  $region19: #{skipgram_forward.1} parent=0 // pred_check_branch
    %31 = sbr.rel (0) target = $region21
  $region20: #{skipgram_forward.1} parent=0 // pred_region
    _
  $region21: #{skipgram_forward.1} parent=0 // pred_fallthru
    _
  // Predicated region
  $region22: #{skipgram_forward.1} parent=0 // pred_check
    _
  $region23: #{skipgram_forward.1} parent=0 // pred_check_branch
    %33 = sbr.rel (0) target = $region25
  $region24: #{skipgram_forward.1} parent=0 // pred_region
    _
  $region25: #{skipgram_forward.1} parent=0 // pred_fallthru
    _
  // Predicated region
  $region26: #{skipgram_forward.1} parent=0 // pred_check
    _
  $region27: #{skipgram_forward.1} parent=0 // pred_check_branch
    %35 = sbr.rel (0) target = $region29
  $region28: #{skipgram_forward.1} parent=0 // pred_region
    _
  $region29: #{skipgram_forward.1} parent=0 // pred_fallthru
    _
  // Predicated region
  $region30: #{skipgram_forward.1} parent=0 // pred_check
    _
  $region31: #{skipgram_forward.1} parent=0 // pred_check_branch
    %37 = sbr.rel (0) target = $region33
  $region32: #{skipgram_forward.1} parent=0 // pred_region
    _
  $region33: #{skipgram_forward.1} parent=0 // pred_fallthru
    _
  // Predicated region
  $region34: #{skipgram_forward.1} parent=0 // pred_check
    _
  $region35: #{skipgram_forward.1} parent=0 // pred_check_branch
    %39 = sbr.rel (0) target = $region37
  $region36: #{skipgram_forward.1} parent=0 // pred_region
    _
  $region37: #{skipgram_forward.1} parent=0 // pred_fallthru
    _
  %s41 = smul.u32 0, 16
  loop: start=0, step=1, limit=16
  $region38: #{skipgram_forward.1} parent=0 // loop_pre_header
    _
  $region39: #{skipgram_forward.1} parent=0 // loop_header
    %s43 = sphi 0, %s47
    %p44 = scmp.ge.s32.totalorder %s43, 16
  $region40: #{skipgram_forward.1} parent=0 // loop_header_branch
    %46 = sbr.rel (%p44) target = $region44
  $region41: #{skipgram_forward.1} parent=0 // loop_body
    %s48 = sadd.s32 %s41, %s43
    %s49 = sld [smem:[#allocation5 + %s48]]
    %s50 = scalar_lea.vmem %s4, %s49
    %s51 = scalar_lea.vmem [#allocation2], %s43
    %p53 = scmp.lt.u32.totalorder 1, 8
    %p54 = pneg %p53
    // Predicated region
    $region45: #{skipgram_forward.1} parent=41 // pred_check
      _
    $region46: #{skipgram_forward.1} parent=41 // pred_check_branch
      %56 = sbr.rel (%p53) target = $region48
    $region47: #{skipgram_forward.1} parent=41 // pred_region
      %s72 = sand.u32 1, 7
      %p73 = scmp.eq.s32.totalorder %s72, 0
      %p74 = pneg %p73
      // Predicated region
      $region60: #{skipgram_forward.1} parent=47 // pred_check
        _
      $region61: #{skipgram_forward.1} parent=47 // pred_check_branch
        %76 = sbr.rel (%p73) target = $region63
      $region62: #{skipgram_forward.1} parent=47 // pred_region
        %s77 = sand.u32 1, 7
        %s78 = ssub.s32 1, %s77
        %s79 = scalar_lea.vmem %s50, %s78
        %s80 = ssub.s32 1, %s77
        %s81 = scalar_lea.vmem %s51, %s80 [#allocation2]
        %s82 = sshll.u32 1, %s77
        %s83 = ssub.s32 %s82, 1
        loop: start=0, step=1, limit=1
        $region64: #{skipgram_forward.1} parent=62 // loop_pre_header
          _
        $region65: #{skipgram_forward.1} parent=62 // loop_header
          %s85 = sphi 0, %s89
          %p86 = scmp.ge.s32.totalorder %s85, 1
          %s90 = sphi %s79, %s79
          %s91 = sphi %s81, %s81
        $region66: #{skipgram_forward.1} parent=62 // loop_header_branch
          %88 = sbr.rel (%p86) target = $region70
        $region67: #{skipgram_forward.1} parent=62 // loop_body
          %v92 = vld [vmem:[%s90] sm:%s83]
          %93 = vst [vmem:[%s91] sm:%s83] %v92
        $region68: #{skipgram_forward.1} parent=62 // loop_footer
          %s89 = sadd.s32 1, %s85
        $region69: #{skipgram_forward.1} parent=62 // loop_footer_branch
          %84 = sbr.rel target = $region65
        $region70: #{skipgram_forward.1} parent=62 // loop_exit
          _
      $region63: #{skipgram_forward.1} parent=47 // pred_fallthru
        _
    $region48: #{skipgram_forward.1} parent=41 // pred_fallthru
      _
    // Predicated region
    $region49: #{skipgram_forward.1} parent=41 // pred_check
      %p57 = pneg %p53
    $region50: #{skipgram_forward.1} parent=41 // pred_check_branch
      %59 = sbr.rel (%p57) target = $region52
    $region51: #{skipgram_forward.1} parent=41 // pred_region
      %s60 = sshll.u32 1, 1
      %s61 = ssub.s32 %s60, 1
      loop: start=0, step=1, limit=1
      $region53: #{skipgram_forward.1} parent=51 // loop_pre_header
        _
      $region54: #{skipgram_forward.1} parent=51 // loop_header
        %s63 = sphi 0, %s67
        %p64 = scmp.ge.s32.totalorder %s63, 1
        %s68 = sphi %s50, %s50
        %s69 = sphi %s51, %s51
      $region55: #{skipgram_forward.1} parent=51 // loop_header_branch
        %66 = sbr.rel (%p64) target = $region59
      $region56: #{skipgram_forward.1} parent=51 // loop_body
        %v70 = vld [vmem:[%s68] sm:%s61]
        %71 = vst [vmem:[%s69] sm:%s61] %v70
      $region57: #{skipgram_forward.1} parent=51 // loop_footer
        %s67 = sadd.s32 1, %s63
      $region58: #{skipgram_forward.1} parent=51 // loop_footer_branch
        %62 = sbr.rel target = $region54
      $region59: #{skipgram_forward.1} parent=51 // loop_exit
        _
    $region52: #{skipgram_forward.1} parent=41 // pred_fallthru
      _
    // Predicated region
    $region71: #{skipgram_forward.1} parent=41 // pred_check
      _
    $region72: #{skipgram_forward.1} parent=41 // pred_check_branch
      %96 = sbr.rel (0) target = $region74
    $region73: #{skipgram_forward.1} parent=41 // pred_region
      %97 = vsyncadd [#allocation3], 16
    $region74: #{skipgram_forward.1} parent=41 // pred_fallthru
      _
  $region42: #{skipgram_forward.1} parent=0 // loop_footer
    %s47 = sadd.s32 1, %s43
  $region43: #{skipgram_forward.1} parent=0 // loop_footer_branch
    %42 = sbr.rel target = $region39
  $region44: #{skipgram_forward.1} parent=0 // loop_exit
    _
  loop: start=0, step=1, limit=16
  $region75: #{skipgram_forward.1} parent=0 // loop_pre_header
    _
  $region76: #{skipgram_forward.1} parent=0 // loop_header
    %s99 = sphi 0, %s103
    %p100 = scmp.ge.s32.totalorder %s99, 16
  $region77: #{skipgram_forward.1} parent=0 // loop_header_branch
    %102 = sbr.rel (%p100) target = $region81
  $region78: #{skipgram_forward.1} parent=0 // loop_body
    %105 = dma.done [#allocation3], 16
  $region79: #{skipgram_forward.1} parent=0 // loop_footer
    %s103 = sadd.s32 1, %s99
  $region80: #{skipgram_forward.1} parent=0 // loop_footer_branch
    %98 = sbr.rel target = $region76
  $region81: #{skipgram_forward.1} parent=0 // loop_exit
    _
  %v106 = vld [vmem:[#allocation2] sm:$0xff]
  %v107 = vld [vmem:[#allocation2 + $0x8] sm:$0xff]
  %v108 = vpack.c.bf16 %v107, %v106
  %v109 = vld [vmem:[%s5] sm:$0xff]
  %v110 = vld [vmem:[%s5 + $0x8] sm:$0xff]
  %v111 = vld [vmem:[%s5 + $0x10] sm:$0xff]
  %v112 = vld [vmem:[%s5 + $0x18] sm:$0xff]
  %v113 = vld [vmem:[%s6] sm:$0x3]
  %v115 = vlaneseq
  %v116 = vshrl.u32 %v115, 7
  %v117 = vsub.s32 0, %v116
  %v118 = vrot.slane %v113, %v117
  %v119 = vlaneseq
  %v120 = vshrl.u32 %v119, 7
  %v121 = vsub.s32 1, %v120
  %v122 = vrot.slane %v113, %v121
  %v129 = vunpack.c.l.b16 %v109
  %v130 = vunpack.c.h.b16 %v109
  %v131 = vunpack.c.l.b16 %v110
  %v132 = vunpack.c.h.b16 %v110
  %v133 = vunpack.c.l.b16 %v111
  %v134 = vunpack.c.h.b16 %v111
  %v135 = vunpack.c.l.b16 %v112
  %v136 = vunpack.c.h.b16 %v112
  %v137 = vpack.c.b16 %v131, %v129
  %v138 = vpack.c.b16 %v132, %v130
  %v139 = vpack.c.b16 %v135, %v133
  %v140 = vpack.c.b16 %v136, %v134
  %vm145 = vcmask 261120
  %v147 = vsel %vm145, %v108, 0
  %149 = vmatprep.subr.bf16.mxu0 0
  %150 = vmatpush1.bf16.msra.mxu0 0
  %151 = vmatprep.subr.bf16.mxu0 0
  %152 = vmatpush1.bf16.msra.mxu0 0
  %153 = vmatprep.subr.bf16.mxu0 0
  %154 = vmatpush1.bf16.msra.mxu0 0
  %155 = vmatprep.subr.bf16.mxu0 0
  %156 = vmatpush1.bf16.msra.mxu0 0
  %157 = vmatprep.subr.bf16.mxu0 0
  %158 = vmatpush1.bf16.msra.mxu0 0
  %159 = vmatprep.subr.bf16.mxu0 0
  %160 = vmatpush1.bf16.msra.mxu0 0
  %161 = vmatprep.subr.bf16.mxu0 %v140
  %162 = vmatpush1.bf16.msra.mxu0 %v139
  %163 = vmatprep.subr.bf16.mxu0 %v138
  %164 = vmatpush1.bf16.msra.mxu0 %v137
  %165 = vmatprep.subr.bf16.mxu0 0
  %166 = vmatpush2.bf16.msra.mxu0 0
  %167 = vmatprep.subr.bf16.mxu0 0
  %168 = vmatpush2.bf16.msra.mxu0 0
  %169 = vmatprep.subr.bf16.mxu0 0
  %170 = vmatpush2.bf16.msra.mxu0 0
  %171 = vmatprep.subr.bf16.mxu0 0
  %172 = vmatpush2.bf16.msra.mxu0 0
  %173 = vmatprep.subr.bf16.mxu0 0
  %174 = vmatpush2.bf16.msra.mxu0 0
  %175 = vmatprep.subr.bf16.mxu0 0
  %176 = vmatpush2.bf16.msra.mxu0 0
  %177 = vmatprep.subr.bf16.mxu0 0
  %178 = vmatpush2.bf16.msra.mxu0 0
  %179 = vmatprep.subr.bf16.mxu0 0
  %180 = vmatpush2.bf16.msra.mxu0 0
  %181 = vmatprep.mubr.bf16.mxu0 0
  %182 = vmatmul.mubr.bf16.gmra.mxu0 %v147
  %v183 = vpop.f32.mrf.mxu0
  %v184 = vadd.f32 %v118, %v183
  %v185 = vpop.f32.mrf.mxu0
  %v186 = vadd.f32 %v122, %v185
  %v187 = vpop.f32.mrf.mxu0
  %v188 = vadd.f32 %v118, %v187
  %v189 = vpop.f32.mrf.mxu0
  %v190 = vadd.f32 %v122, %v189
  %191 = vdwg.mxu0
  %v192 = vmax.f32 %v184, 0.0
  %v193 = vmax.f32 %v186, 0.0
  %v194 = vmax.f32 %v188, 0.0
  %v195 = vmax.f32 %v190, 0.0
  %v196 = vpack.c.bf16 %v194, %v192
  %v197 = vpack.c.bf16 %v195, %v193
  %v198 = vld [vmem:[%s7] sm:$0xff]
  %v199 = vld [vmem:[%s7 + $0x8] sm:$0xff]
  %v200 = vld [vmem:[%s7 + $0x10] sm:$0xff]
  %v201 = vld [vmem:[%s7 + $0x18] sm:$0xff]
  %v202 = vld [vmem:[%s7 + $0x20] sm:$0xff]
  %v203 = vld [vmem:[%s7 + $0x28] sm:$0xff]
  %v204 = vld [vmem:[%s7 + $0x30] sm:$0xff]
  %v205 = vld [vmem:[%s7 + $0x38] sm:$0xff]
  %v206 = vld [vmem:[%s7 + $0x40] sm:$0xff]
  %v207 = vld [vmem:[%s7 + $0x48] sm:$0xff]
  %v208 = vld [vmem:[%s7 + $0x50] sm:$0xff]
  %v209 = vld [vmem:[%s7 + $0x58] sm:$0xff]
  %v210 = vld [vmem:[%s7 + $0x60] sm:$0xff]
  %v211 = vld [vmem:[%s7 + $0x68] sm:$0xff]
  %v212 = vld [vmem:[%s7 + $0x70] sm:$0xff]
  %v213 = vld [vmem:[%s7 + $0x78] sm:$0xff]
  %v214 = vld [vmem:[%s7 + $0x80] sm:$0xff]
  %v215 = vld [vmem:[%s7 + $0x88] sm:$0xff]
  %v216 = vld [vmem:[%s7 + $0x90] sm:$0xff]
  %v217 = vld [vmem:[%s7 + $0x98] sm:$0xff]
  %v218 = vld [vmem:[%s7 + $0xa0] sm:$0xff]
  %v219 = vld [vmem:[%s7 + $0xa8] sm:$0xff]
  %v220 = vld [vmem:[%s7 + $0xb0] sm:$0xff]
  %v221 = vld [vmem:[%s7 + $0xb8] sm:$0xff]
  %v222 = vld [vmem:[%s7 + $0xc0] sm:$0xff]
  %v223 = vld [vmem:[%s7 + $0xc8] sm:$0xff]
  %v224 = vld [vmem:[%s7 + $0xd0] sm:$0xff]
  %v225 = vld [vmem:[%s7 + $0xd8] sm:$0xff]
  %v226 = vld [vmem:[%s7 + $0xe0] sm:$0xff]
  %v227 = vld [vmem:[%s7 + $0xe8] sm:$0xff]
  %v228 = vld [vmem:[%s7 + $0xf0] sm:$0xff]
  %v229 = vld [vmem:[%s7 + $0xf8] sm:$0xff]
  %v230 = vld [vmem:[%s8] sm:$0x3]
  %v232 = vlaneseq
  %v233 = vshrl.u32 %v232, 7
  %v234 = vsub.s32 0, %v233
  %v235 = vrot.slane %v230, %v234
  %v236 = vlaneseq
  %v237 = vshrl.u32 %v236, 7
  %v238 = vsub.s32 1, %v237
  %v239 = vrot.slane %v230, %v238
  %v274 = vunpack.c.l.b16 %v198
  %v275 = vunpack.c.h.b16 %v198
  %v276 = vunpack.c.l.b16 %v199
  %v277 = vunpack.c.h.b16 %v199
  %v278 = vunpack.c.l.b16 %v200
  %v279 = vunpack.c.h.b16 %v200
  %v280 = vunpack.c.l.b16 %v201
  %v281 = vunpack.c.h.b16 %v201
  %v282 = vunpack.c.l.b16 %v202
  %v283 = vunpack.c.h.b16 %v202
  %v284 = vunpack.c.l.b16 %v203
  %v285 = vunpack.c.h.b16 %v203
  %v286 = vunpack.c.l.b16 %v204
  %v287 = vunpack.c.h.b16 %v204
  %v288 = vunpack.c.l.b16 %v205
  %v289 = vunpack.c.h.b16 %v205
  %v290 = vunpack.c.l.b16 %v206
  %v291 = vunpack.c.h.b16 %v206
  %v292 = vunpack.c.l.b16 %v207
  %v293 = vunpack.c.h.b16 %v207
  %v294 = vunpack.c.l.b16 %v208
  %v295 = vunpack.c.h.b16 %v208
  %v296 = vunpack.c.l.b16 %v209
  %v297 = vunpack.c.h.b16 %v209
  %v298 = vunpack.c.l.b16 %v210
  %v299 = vunpack.c.h.b16 %v210
  %v300 = vunpack.c.l.b16 %v211
  %v301 = vunpack.c.h.b16 %v211
  %v302 = vunpack.c.l.b16 %v212
  %v303 = vunpack.c.h.b16 %v212
  %v304 = vunpack.c.l.b16 %v213
  %v305 = vunpack.c.h.b16 %v213
  %v306 = vunpack.c.l.b16 %v214
  %v307 = vunpack.c.h.b16 %v214
  %v308 = vunpack.c.l.b16 %v215
  %v309 = vunpack.c.h.b16 %v215
  %v310 = vunpack.c.l.b16 %v216
  %v311 = vunpack.c.h.b16 %v216
  %v312 = vunpack.c.l.b16 %v217
  %v313 = vunpack.c.h.b16 %v217
  %v314 = vunpack.c.l.b16 %v218
  %v315 = vunpack.c.h.b16 %v218
  %v316 = vunpack.c.l.b16 %v219
  %v317 = vunpack.c.h.b16 %v219
  %v318 = vunpack.c.l.b16 %v220
  %v319 = vunpack.c.h.b16 %v220
  %v320 = vunpack.c.l.b16 %v221
  %v321 = vunpack.c.h.b16 %v221
  %v322 = vunpack.c.l.b16 %v222
  %v323 = vunpack.c.h.b16 %v222
  %v324 = vunpack.c.l.b16 %v223
  %v325 = vunpack.c.h.b16 %v223
  %v326 = vunpack.c.l.b16 %v224
  %v327 = vunpack.c.h.b16 %v224
  %v328 = vunpack.c.l.b16 %v225
  %v329 = vunpack.c.h.b16 %v225
  %v330 = vunpack.c.l.b16 %v226
  %v331 = vunpack.c.h.b16 %v226
  %v332 = vunpack.c.l.b16 %v227
  %v333 = vunpack.c.h.b16 %v227
  %v334 = vunpack.c.l.b16 %v228
  %v335 = vunpack.c.h.b16 %v228
  %v336 = vunpack.c.l.b16 %v229
  %v337 = vunpack.c.h.b16 %v229
  %v338 = vpack.c.b16 %v276, %v274
  %v339 = vpack.c.b16 %v277, %v275
  %v340 = vpack.c.b16 %v280, %v278
  %v341 = vpack.c.b16 %v281, %v279
  %v342 = vpack.c.b16 %v284, %v282
  %v343 = vpack.c.b16 %v285, %v283
  %v344 = vpack.c.b16 %v288, %v286
  %v345 = vpack.c.b16 %v289, %v287
  %v346 = vpack.c.b16 %v292, %v290
  %v347 = vpack.c.b16 %v293, %v291
  %v348 = vpack.c.b16 %v296, %v294
  %v349 = vpack.c.b16 %v297, %v295
  %v350 = vpack.c.b16 %v300, %v298
  %v351 = vpack.c.b16 %v301, %v299
  %v352 = vpack.c.b16 %v304, %v302
  %v353 = vpack.c.b16 %v305, %v303
  %v354 = vpack.c.b16 %v308, %v306
  %v355 = vpack.c.b16 %v309, %v307
  %v356 = vpack.c.b16 %v312, %v310
  %v357 = vpack.c.b16 %v313, %v311
  %v358 = vpack.c.b16 %v316, %v314
  %v359 = vpack.c.b16 %v317, %v315
  %v360 = vpack.c.b16 %v320, %v318
  %v361 = vpack.c.b16 %v321, %v319
  %v362 = vpack.c.b16 %v324, %v322
  %v363 = vpack.c.b16 %v325, %v323
  %v364 = vpack.c.b16 %v328, %v326
  %v365 = vpack.c.b16 %v329, %v327
  %v366 = vpack.c.b16 %v332, %v330
  %v367 = vpack.c.b16 %v333, %v331
  %v368 = vpack.c.b16 %v336, %v334
  %v369 = vpack.c.b16 %v337, %v335
  %402 = vmatprep.subr.bf16.mxu0 %v353
  %403 = vmatpush1.bf16.msra.mxu0 %v352
  %404 = vmatprep.subr.bf16.mxu0 %v351
  %405 = vmatpush1.bf16.msra.mxu0 %v350
  %406 = vmatprep.subr.bf16.mxu0 %v349
  %407 = vmatpush1.bf16.msra.mxu0 %v348
  %408 = vmatprep.subr.bf16.mxu0 %v347
  %409 = vmatpush1.bf16.msra.mxu0 %v346
  %410 = vmatprep.subr.bf16.mxu0 %v345
  %411 = vmatpush1.bf16.msra.mxu0 %v344
  %412 = vmatprep.subr.bf16.mxu0 %v343
  %413 = vmatpush1.bf16.msra.mxu0 %v342
  %414 = vmatprep.subr.bf16.mxu0 %v341
  %415 = vmatpush1.bf16.msra.mxu0 %v340
  %416 = vmatprep.subr.bf16.mxu0 %v339
  %417 = vmatpush1.bf16.msra.mxu0 %v338
  %418 = vmatprep.subr.bf16.mxu0 %v369
  %419 = vmatpush2.bf16.msra.mxu0 %v368
  %420 = vmatprep.subr.bf16.mxu0 %v367
  %421 = vmatpush2.bf16.msra.mxu0 %v366
  %422 = vmatprep.subr.bf16.mxu0 %v365
  %423 = vmatpush2.bf16.msra.mxu0 %v364
  %424 = vmatprep.subr.bf16.mxu0 %v363
  %425 = vmatpush2.bf16.msra.mxu0 %v362
  %426 = vmatprep.subr.bf16.mxu0 %v361
  %427 = vmatpush2.bf16.msra.mxu0 %v360
  %428 = vmatprep.subr.bf16.mxu0 %v359
  %429 = vmatpush2.bf16.msra.mxu0 %v358
  %430 = vmatprep.subr.bf16.mxu0 %v357
  %431 = vmatpush2.bf16.msra.mxu0 %v356
  %432 = vmatprep.subr.bf16.mxu0 %v355
  %433 = vmatpush2.bf16.msra.mxu0 %v354
  %434 = vmatprep.mubr.bf16.mxu0 %v197
  %435 = vmatmul.mubr.bf16.gmra.mxu0 %v196
  %v436 = vpop.f32.mrf.mxu0
  %v437 = vadd.f32 %v235, %v436
  %v438 = vpop.f32.mrf.mxu0
  %v439 = vadd.f32 %v239, %v438
  %v440 = vpop.f32.mrf.mxu0
  %v441 = vadd.f32 %v235, %v440
  %v442 = vpop.f32.mrf.mxu0
  %v443 = vadd.f32 %v239, %v442
  %444 = vdwg.mxu0
  %v445 = vmax.f32 %v437, 0.0
  %v446 = vmax.f32 %v439, 0.0
  %v447 = vmax.f32 %v441, 0.0
  %v448 = vmax.f32 %v443, 0.0
  %v449 = vpack.c.bf16 %v447, %v445
  %v450 = vpack.c.bf16 %v448, %v446
  %v451 = vld [vmem:[%s9] sm:$0xff]
  %v452 = vld [vmem:[%s9 + $0x8] sm:$0xff]
  %v453 = vld [vmem:[%s9 + $0x10] sm:$0xff]
  %v454 = vld [vmem:[%s9 + $0x18] sm:$0xff]
  %v455 = vld [vmem:[%s9 + $0x20] sm:$0xff]
  %v456 = vld [vmem:[%s9 + $0x28] sm:$0xff]
  %v457 = vld [vmem:[%s9 + $0x30] sm:$0xff]
  %v458 = vld [vmem:[%s9 + $0x38] sm:$0xff]
  %v459 = vld [vmem:[%s9 + $0x40] sm:$0xff]
  %v460 = vld [vmem:[%s9 + $0x48] sm:$0xff]
  %v461 = vld [vmem:[%s9 + $0x50] sm:$0xff]
  %v462 = vld [vmem:[%s9 + $0x58] sm:$0xff]
  %v463 = vld [vmem:[%s9 + $0x60] sm:$0xff]
  %v464 = vld [vmem:[%s9 + $0x68] sm:$0xff]
  %v465 = vld [vmem:[%s9 + $0x70] sm:$0xff]
  %v466 = vld [vmem:[%s9 + $0x78] sm:$0xff]
  %v467 = vld [vmem:[%s9 + $0x80] sm:$0xff]
  %v468 = vld [vmem:[%s9 + $0x88] sm:$0xff]
  %v469 = vld [vmem:[%s9 + $0x90] sm:$0xff]
  %v470 = vld [vmem:[%s9 + $0x98] sm:$0xff]
  %v471 = vld [vmem:[%s9 + $0xa0] sm:$0xff]
  %v472 = vld [vmem:[%s9 + $0xa8] sm:$0xff]
  %v473 = vld [vmem:[%s9 + $0xb0] sm:$0xff]
  %v474 = vld [vmem:[%s9 + $0xb8] sm:$0xff]
  %v475 = vld [vmem:[%s9 + $0xc0] sm:$0xff]
  %v476 = vld [vmem:[%s9 + $0xc8] sm:$0xff]
  %v477 = vld [vmem:[%s9 + $0xd0] sm:$0xff]
  %v478 = vld [vmem:[%s9 + $0xd8] sm:$0xff]
  %v479 = vld [vmem:[%s9 + $0xe0] sm:$0xff]
  %v480 = vld [vmem:[%s9 + $0xe8] sm:$0xff]
  %v481 = vld [vmem:[%s10] sm:$0x3]
  %v483 = vlaneseq
  %v484 = vshrl.u32 %v483, 7
  %v485 = vsub.s32 0, %v484
  %v486 = vrot.slane %v481, %v485
  %v487 = vlaneseq
  %v488 = vshrl.u32 %v487, 7
  %v489 = vsub.s32 1, %v488
  %v490 = vrot.slane %v481, %v489
  %v523 = vunpack.c.l.b16 %v451
  %v524 = vunpack.c.h.b16 %v451
  %v525 = vunpack.c.l.b16 %v452
  %v526 = vunpack.c.h.b16 %v452
  %v527 = vunpack.c.l.b16 %v453
  %v528 = vunpack.c.h.b16 %v453
  %v529 = vunpack.c.l.b16 %v454
  %v530 = vunpack.c.h.b16 %v454
  %v531 = vunpack.c.l.b16 %v455
  %v532 = vunpack.c.h.b16 %v455
  %v533 = vunpack.c.l.b16 %v456
  %v534 = vunpack.c.h.b16 %v456
  %v535 = vunpack.c.l.b16 %v457
  %v536 = vunpack.c.h.b16 %v457
  %v537 = vunpack.c.l.b16 %v458
  %v538 = vunpack.c.h.b16 %v458
  %v539 = vunpack.c.l.b16 %v459
  %v540 = vunpack.c.h.b16 %v459
  %v541 = vunpack.c.l.b16 %v460
  %v542 = vunpack.c.h.b16 %v460
  %v543 = vunpack.c.l.b16 %v461
  %v544 = vunpack.c.h.b16 %v461
  %v545 = vunpack.c.l.b16 %v462
  %v546 = vunpack.c.h.b16 %v462
  %v547 = vunpack.c.l.b16 %v463
  %v548 = vunpack.c.h.b16 %v463
  %v549 = vunpack.c.l.b16 %v464
  %v550 = vunpack.c.h.b16 %v464
  %v551 = vunpack.c.l.b16 %v465
  %v552 = vunpack.c.h.b16 %v465
  %v553 = vunpack.c.l.b16 %v466
  %v554 = vunpack.c.h.b16 %v466
  %v555 = vunpack.c.l.b16 %v467
  %v556 = vunpack.c.h.b16 %v467
  %v557 = vunpack.c.l.b16 %v468
  %v558 = vunpack.c.h.b16 %v468
  %v559 = vunpack.c.l.b16 %v469
  %v560 = vunpack.c.h.b16 %v469
  %v561 = vunpack.c.l.b16 %v470
  %v562 = vunpack.c.h.b16 %v470
  %v563 = vunpack.c.l.b16 %v471
  %v564 = vunpack.c.h.b16 %v471
  %v565 = vunpack.c.l.b16 %v472
  %v566 = vunpack.c.h.b16 %v472
  %v567 = vunpack.c.l.b16 %v473
  %v568 = vunpack.c.h.b16 %v473
  %v569 = vunpack.c.l.b16 %v474
  %v570 = vunpack.c.h.b16 %v474
  %v571 = vunpack.c.l.b16 %v475
  %v572 = vunpack.c.h.b16 %v475
  %v573 = vunpack.c.l.b16 %v476
  %v574 = vunpack.c.h.b16 %v476
  %v575 = vunpack.c.l.b16 %v477
  %v576 = vunpack.c.h.b16 %v477
  %v577 = vunpack.c.l.b16 %v478
  %v578 = vunpack.c.h.b16 %v478
  %v579 = vunpack.c.l.b16 %v479
  %v580 = vunpack.c.h.b16 %v479
  %v581 = vunpack.c.l.b16 %v480
  %v582 = vunpack.c.h.b16 %v480
  %v583 = vpack.c.b16 %v525, %v523
  %v584 = vpack.c.b16 %v526, %v524
  %v585 = vpack.c.b16 %v529, %v527
  %v586 = vpack.c.b16 %v530, %v528
  %v587 = vpack.c.b16 %v533, %v531
  %v588 = vpack.c.b16 %v534, %v532
  %v589 = vpack.c.b16 %v537, %v535
  %v590 = vpack.c.b16 %v538, %v536
  %v591 = vpack.c.b16 %v541, %v539
  %v592 = vpack.c.b16 %v542, %v540
  %v593 = vpack.c.b16 %v545, %v543
  %v594 = vpack.c.b16 %v546, %v544
  %v595 = vpack.c.b16 %v549, %v547
  %v596 = vpack.c.b16 %v550, %v548
  %v597 = vpack.c.b16 %v553, %v551
  %v598 = vpack.c.b16 %v554, %v552
  %v599 = vpack.c.b16 %v557, %v555
  %v600 = vpack.c.b16 %v558, %v556
  %v601 = vpack.c.b16 %v561, %v559
  %v602 = vpack.c.b16 %v562, %v560
  %v603 = vpack.c.b16 %v565, %v563
  %v604 = vpack.c.b16 %v566, %v564
  %v605 = vpack.c.b16 %v569, %v567
  %v606 = vpack.c.b16 %v570, %v568
  %v607 = vpack.c.b16 %v573, %v571
  %v608 = vpack.c.b16 %v574, %v572
  %v609 = vpack.c.b16 %v577, %v575
  %v610 = vpack.c.b16 %v578, %v576
  %v611 = vpack.c.b16 %v581, %v579
  %v612 = vpack.c.b16 %v582, %v580
  %vm643 = vcmask 916480
  %v645 = vsel %vm643, %v450, 0
  %647 = vmatprep.subr.bf16.mxu0 %v598
  %648 = vmatpush1.bf16.msra.mxu0 %v597
  %649 = vmatprep.subr.bf16.mxu0 %v596
  %650 = vmatpush1.bf16.msra.mxu0 %v595
  %651 = vmatprep.subr.bf16.mxu0 %v594
  %652 = vmatpush1.bf16.msra.mxu0 %v593
  %653 = vmatprep.subr.bf16.mxu0 %v592
  %654 = vmatpush1.bf16.msra.mxu0 %v591
  %655 = vmatprep.subr.bf16.mxu0 %v590
  %656 = vmatpush1.bf16.msra.mxu0 %v589
  %657 = vmatprep.subr.bf16.mxu0 %v588
  %658 = vmatpush1.bf16.msra.mxu0 %v587
  %659 = vmatprep.subr.bf16.mxu0 %v586
  %660 = vmatpush1.bf16.msra.mxu0 %v585
  %661 = vmatprep.subr.bf16.mxu0 %v584
  %662 = vmatpush1.bf16.msra.mxu0 %v583
  %663 = vmatprep.subr.bf16.mxu0 0
  %664 = vmatpush2.bf16.msra.mxu0 0
  %665 = vmatprep.subr.bf16.mxu0 %v612
  %666 = vmatpush2.bf16.msra.mxu0 %v611
  %667 = vmatprep.subr.bf16.mxu0 %v610
  %668 = vmatpush2.bf16.msra.mxu0 %v609
  %669 = vmatprep.subr.bf16.mxu0 %v608
  %670 = vmatpush2.bf16.msra.mxu0 %v607
  %671 = vmatprep.subr.bf16.mxu0 %v606
  %672 = vmatpush2.bf16.msra.mxu0 %v605
  %673 = vmatprep.subr.bf16.mxu0 %v604
  %674 = vmatpush2.bf16.msra.mxu0 %v603
  %675 = vmatprep.subr.bf16.mxu0 %v602
  %676 = vmatpush2.bf16.msra.mxu0 %v601
  %677 = vmatprep.subr.bf16.mxu0 %v600
  %678 = vmatpush2.bf16.msra.mxu0 %v599
  %679 = vmatprep.mubr.bf16.mxu0 %v645
  %680 = vmatmul.mubr.bf16.gmra.mxu0 %v449
  %v681 = vpop.f32.mrf.mxu0
  %v682 = vadd.f32 %v486, %v681
  %v683 = vpop.f32.mrf.mxu0
  %v684 = vadd.f32 %v490, %v683
  %v685 = vpop.f32.mrf.mxu0
  %v686 = vadd.f32 %v486, %v685
  %v687 = vpop.f32.mrf.mxu0
  %v688 = vadd.f32 %v490, %v687
  %689 = vdwg.mxu0
  %v690 = vld [vmem:[%s1] sm:$0xff]
  %v691 = vld [vmem:[%s1 + $0x8] sm:$0xff]
  %vm692 = vcmp.ge.s32.totalorder %v690, 0
  %vm693 = vcmp.ge.s32.totalorder %v691, 0
  %v694 = vsel %vm692, 1, 0
  %v695 = vsel %vm693, 1, 0
  %v696 = vcvt.s32.f32 %v694
  %v697 = vcvt.s32.f32 %v695
  %v698 = vlaneseq
  %v699 = vand.u32 %v698, 127
  %700 = vmax.xlane.f32.xlu0 %v682
  %v701 = vpop.xlane.xlu0 %700
  %702 = vmax.xlane.f32.xlu0 %v686
  %v703 = vpop.xlane.xlu0 %702
  %v704 = vsub.f32 %v682, %v701
  %v705 = vsub.f32 %v686, %v703
  %v706 = vmul.f32 %v704, 1.442695
  %v707 = vpow.pop %v706
  %v708 = vmul.f32 %v705, 1.442695
  %v709 = vpow.pop %v708
  %710 = vadd.xlane.f32.xlu0 %v707
  %v711 = vpop.xlane.xlu0 %710
  %712 = vadd.xlane.f32.xlu0 %v709
  %v713 = vpop.xlane.xlu0 %712
  %v714 = vlog2.pop %v711
  %v715 = vmul.f32 %v714, 0.6931472
  %v716 = vlog2.pop %v713
  %v717 = vmul.f32 %v716, 0.6931472
  %v718 = vadd.f32 %v715, %v701
  %v719 = vadd.f32 %v717, %v703
  %720 = vset.pattern.permute.xlu0 0
  %721 = vperm.xlu0 %720, %v690
  %v722 = vpop.permute.xlu0 %721
  %723 = vset.pattern.permute.xlu0 0
  %724 = vperm.xlu0 %723, %v691
  %v725 = vpop.permute.xlu0 %724
  %vm726 = vcmp.eq.s32.totalorder %v699, %v722
  %vm727 = vcmp.eq.s32.totalorder %v699, %v725
  %v728 = vsel %vm726, %v682, 0.0
  %v729 = vsel %vm727, %v686, 0.0
  %730 = vadd.xlane.f32.xlu0 %v728
  %v731 = vpop.xlane.xlu0 %730
  %732 = vadd.xlane.f32.xlu0 %v729
  %v733 = vpop.xlane.xlu0 %732
  %v734 = vsub.f32 %v718, %v731
  %v735 = vsub.f32 %v719, %v733
  %v736 = vld [vmem:[%s2] sm:$0xff]
  %v737 = vld [vmem:[%s2 + $0x8] sm:$0xff]
  %v738 = vsub.f32 %v684, %v736
  %v739 = vsub.f32 %v688, %v737
  %v740 = vmul.f32 %v738, %v738
  %v741 = vmul.f32 %v739, %v739
  %vm742 = vcmask 130048
  %v743 = vsel %vm742, %v740, 0.0
  %744 = vadd.xlane.f32.xlu0 %v743
  %v745 = vpop.xlane.xlu0 %744
  %v746 = vsel %vm742, %v741, 0.0
  %747 = vadd.xlane.f32.xlu0 %v746
  %v748 = vpop.xlane.xlu0 %747
  %v749 = vmul.f32 %v745, 0.0625
  %v750 = vmul.f32 %v748, 0.0625
  %v751 = vld [vmem:[%s3] sm:$0xff]
  %v752 = vld [vmem:[%s3 + $0x8] sm:$0xff]
  %755 = vrot.lane.b32.xlu0 %v751, 16
  %v756 = vpop.permute.xlu0 %755
  %757 = vrot.lane.b32.xlu0 %v752, 16
  %v758 = vpop.permute.xlu0 %757
  %v761 = vsub.f32 %v684, %v756
  %v762 = vsub.f32 %v688, %v758
  %v763 = vmul.f32 %v761, %v761
  %v764 = vmul.f32 %v762, %v762
  %767 = vrot.lane.b32.xlu0 %v763, 112
  %v768 = vpop.permute.xlu0 %767
  %769 = vrot.lane.b32.xlu0 %v764, 112
  %v770 = vpop.permute.xlu0 %769
  %vm773 = vcmask 64512
  %v774 = vsel %vm773, %v768, 0.0
  %775 = vadd.xlane.f32.xlu0 %v774
  %v776 = vpop.xlane.xlu0 %775
  %v777 = vsel %vm773, %v770, 0.0
  %778 = vadd.xlane.f32.xlu0 %v777
  %v779 = vpop.xlane.xlu0 %778
  %v780 = vmul.f32 %v776, 0.125
  %v781 = vmul.f32 %v779, 0.125
  %784 = vrot.lane.b32.xlu0 %v106, 120
  %v785 = vpop.permute.xlu0 %784
  %786 = vrot.lane.b32.xlu0 %v107, 120
  %v787 = vpop.permute.xlu0 %786
  %v790 = vmul.f32 %v684, %v785
  %v791 = vmul.f32 %v688, %v787
  %794 = vrot.lane.b32.xlu0 %v790, 104
  %v795 = vpop.permute.xlu0 %794
  %796 = vrot.lane.b32.xlu0 %v791, 104
  %v797 = vpop.permute.xlu0 %796
  %v800 = vsel %vm145, %v795, 0.0
  %801 = vadd.xlane.f32.xlu0 %v800
  %v802 = vpop.xlane.xlu0 %801
  %v803 = vsel %vm145, %v797, 0.0
  %804 = vadd.xlane.f32.xlu0 %v803
  %v805 = vpop.xlane.xlu0 %804
  %v806 = vmul.f32 %v684, %v684
  %v807 = vmul.f32 %v688, %v688
  %810 = vrot.lane.b32.xlu0 %v806, 104
  %v811 = vpop.permute.xlu0 %810
  %812 = vrot.lane.b32.xlu0 %v807, 104
  %v813 = vpop.permute.xlu0 %812
  %v816 = vsel %vm145, %v811, 0.0
  %817 = vadd.xlane.f32.xlu0 %v816
  %v818 = vpop.xlane.xlu0 %817
  %v819 = vsel %vm145, %v813, 0.0
  %820 = vadd.xlane.f32.xlu0 %v819
  %v821 = vpop.xlane.xlu0 %820
  %v822 = vmax.f32 %v818, 1e-16
  %v823 = vmax.f32 %v821, 1e-16
  %v824 = vmul.f32 %v106, %v106
  %v825 = vmul.f32 %v107, %v107
  %828 = vrot.lane.b32.xlu0 %v824, 96
  %v829 = vpop.permute.xlu0 %828
  %830 = vrot.lane.b32.xlu0 %v825, 96
  %v831 = vpop.permute.xlu0 %830
  %v834 = vsel %vm145, %v829, 0.0
  %835 = vadd.xlane.f32.xlu0 %v834
  %v836 = vpop.xlane.xlu0 %835
  %v837 = vsel %vm145, %v831, 0.0
  %838 = vadd.xlane.f32.xlu0 %v837
  %v839 = vpop.xlane.xlu0 %838
  %v840 = vmax.f32 %v836, 1e-16
  %v841 = vmax.f32 %v839, 1e-16
  %v842 = vsub.f32 0.0, %v802
  %v843 = vsub.f32 0.0, %v805
  %v844 = vrsqrt.pop %v822
  %v845 = vrsqrt.pop %v823
  %v846 = vmul.f32 %v842, %v844
  %v847 = vmul.f32 %v843, %v845
  %v848 = vrsqrt.pop %v840
  %v849 = vrsqrt.pop %v841
  %v850 = vmul.f32 %v846, %v848
  %v851 = vmul.f32 %v847, %v849
  %vm852 = vcmp.eq.s32.totalorder %v699, 0
  %v853 = vsel %vm852, %v734, 0.0
  %v854 = vsel %vm852, %v735, 0.0
  %vm855 = vcmp.eq.s32.totalorder %v699, 1
  %v856 = vsel %vm855, %v749, 0.0
  %v857 = vsel %vm855, %v750, 0.0
  %v858 = vadd.f32 %v853, %v856
  %v859 = vadd.f32 %v854, %v857
  %vm860 = vcmp.eq.s32.totalorder %v699, 2
  %v861 = vsel %vm860, %v780, 0.0
  %v862 = vsel %vm860, %v781, 0.0
  %v863 = vadd.f32 %v858, %v861
  %v864 = vadd.f32 %v859, %v862
  %vm865 = vcmp.eq.s32.totalorder %v699, 3
  %v866 = vsel %vm865, %v850, 0.0
  %v867 = vsel %vm865, %v851, 0.0
  %v868 = vadd.f32 %v863, %v866
  %v869 = vadd.f32 %v864, %v867
  %871 = vset.pattern.permute.xlu0 0
  %872 = vperm.xlu0 %871, %v696
  %v873 = vpop.permute.xlu0 %872
  %876 = vset.pattern.permute.xlu0 0
  %877 = vperm.xlu0 %876, %v697
  %v878 = vpop.permute.xlu0 %877
  %v880 = vmul.f32 %v868, %v873
  %v881 = vmul.f32 %v869, %v878
  %vm882 = vcmask 31744
  %v883 = vsel %vm882, %v880, 0.0
  %v884 = vsel %vm882, %v881, 0.0
  %v885 = vadd.f32 %v883, %v884
  %v886 = vrot.slane %v885, 4
  %v887 = vadd.f32 %v885, %v886
  %v888 = vrot.slane %v887, 2
  %v889 = vadd.f32 %v887, %v888
  %v890 = vrot.slane %v889, 1
  %v891 = vadd.f32 %v889, %v890
  %vm892 = vcmask 24576
  %893 = vst.msk [vmem:[%s11] sm:$0x1] %vm892, %v891
  // Predicated region
  $region82: #{skipgram_forward.1} parent=0 // pred_check
    _
  $region83: #{skipgram_forward.1} parent=0 // pred_check_branch
    %895 = sbr.rel (0) target = $region85
  $region84: #{skipgram_forward.1} parent=0 // pred_region
    _
  $region85: #{skipgram_forward.1} parent=0 // pred_fallthru
    _
  // Predicated region
  $region86: #{skipgram_forward.1} parent=0 // pred_check
    _
  $region87: #{skipgram_forward.1} parent=0 // pred_check_branch
    %897 = sbr.rel (0) target = $region89
  $region88: #{skipgram_forward.1} parent=0 // pred_region
    _
  $region89: #{skipgram_forward.1} parent=0 // pred_fallthru
    _
  %898 = vsyncmov [#allocation3]
  %s899 = vpop.sfrf %898
  %p900 = scmp.eq.s32.totalorder %s899, 0
  %p901 = pneg %p900
  %903 = shalt.err (%p901)

</llo_original>
